<compile_context>
chip_gen: v7x
topology: tpu7x:2x2x1
jax: 0.10.0
libtpu: 0.0.40
codegen_flags: <defaults>
</compile_context>

<pallas_src>
import math

import jax
import jax.numpy as jnp
from jax.experimental import pallas as pl
from jax.experimental.pallas import tpu as pltpu


def _disc_kernel(xT_ref, w1_ref, b1_ref, w2_ref, b2_ref, o_ref):
    # zT = W_fc (H, D) @ xT (D, bm) -> (H, bm); f32 accumulation on the MXU.
    z = jnp.dot(w1_ref[...], xT_ref[...], preferred_element_type=jnp.float32)
    z = jnp.maximum(z + b1_ref[...], 0.0)          # (H, bm) + (H, 1) broadcast; ReLU on VPU
    # yT = W_out (1, H) @ zT (H, bm) -> (1, bm); lane-dense output row.
    y = jnp.dot(w2_ref[...], z, preferred_element_type=jnp.float32)
    o_ref[...] = (y + b2_ref[0]).astype(o_ref.dtype)   # b_out scalar from SMEM


def _pick_block_batch(B, D, H, x_bytes, requested):
    """Pick a lane-dense batch tile: multiple of 128 (or the full batch)."""
    if requested is not None:
        bb = int(requested)
        if bb != B and (B % bb != 0 or bb % 128 != 0):
            raise ValueError(
                "block_batch must equal the batch size or be a multiple of 128 "
                "that divides the batch size (got %d for batch %d)" % (bb, B))
        return bb

    # Prefer a pipelined tile (grid > 1) of 128..2048 rows.
    bb = B
    for cand in (2048, 1024, 512, 256, 128):
        if B % cand == 0 and B // cand >= 2:
            bb = cand
            break

    # Conservative VMEM cap (safe for v7x 64 MiB physical / default scoped limits).
    budget = 12 * 1024 * 1024

    def est(b):
        return (2 * D * b * x_bytes                    # double-buffered xT tile
                + 2 * 1 * b * 4                        # double-buffered output tile
                + 2 * (H * D * x_bytes + H * 4 + H * 4)  # weights + b_fc blocks
                + H * b * 4)                           # zT intermediate

    while est(bb) > budget:
        nb = bb // 2
        if nb >= 128 and nb % 128 == 0 and B % nb == 0:
            bb = nb
        else:
            break
    return bb


def discriminator_forward(x, w_fc, b_fc, w_out, b_out, *,
                          block_batch=None, use_bf16=False):
    """Fused Discriminator forward.

    x:     (B, in_dim + cond_size) f32
    w_fc:  (hid_dim, in_dim + cond_size)   -- PyTorch nn.Linear layout (out, in)
    b_fc:  (hid_dim,)
    w_out: (1, hid_dim)
    b_out: (1,)
    Returns (B, 1) f32.
    """
    B, D = x.shape
    H, D2 = w_fc.shape
    assert D == D2, "w_fc feature dim must match x"
    assert w_out.shape == (1, H)

    in_dtype = jnp.bfloat16 if use_bf16 else x.dtype
    x_bytes = jnp.dtype(in_dtype).itemsize
    bb = _pick_block_batch(B, D, H, x_bytes, block_batch)
    grid = (B // bb,)

    # Layout plumbing in the wrapper: batch -> lane axis.
    xT = x.astype(in_dtype).T                       # (D, B)
    w1 = w_fc.astype(in_dtype)                      # (H, D)
    b1 = b_fc.astype(jnp.float32).reshape(H, 1)     # broadcasts over lanes
    w2 = w_out.astype(jnp.float32)                  # (1, H)
    b2 = b_out.astype(jnp.float32).reshape(1)       # scalar via SMEM

    yT = pl.pallas_call(
        _disc_kernel,
        out_shape=jax.ShapeDtypeStruct((1, B), jnp.float32),
        grid_spec=pltpu.PrefetchScalarGridSpec(
            num_scalar_prefetch=0,
            grid=grid,
            in_specs=[
                pl.BlockSpec((D, bb), lambda i: (0, i)),   # xT tile (lane = batch)
                pl.BlockSpec((H, D), lambda i: (0, 0)),    # W_fc (full, resident)
                pl.BlockSpec((H, 1), lambda i: (0, 0)),    # b_fc column
                pl.BlockSpec((1, H), lambda i: (0, 0)),    # W_out row
                pl.BlockSpec(memory_space=pltpu.MemorySpace.SMEM),  # b_out scalar
            ],
            out_specs=pl.BlockSpec((1, bb), lambda i: (0, i)),      # lane-dense output
        ),
        compiler_params=pltpu.CompilerParams(
            dimension_semantics=("parallel",),   # megacore sharding on v7x
        ),
    )(xT, w1, b1, w2, b2)

    return yT.reshape(B, 1)


def init_params(key, in_dim, hid_dim, cond_size):
    """Deterministic init mimicking nn.Linear default U[-1/sqrt(fan_in), 1/sqrt(fan_in)].

    Weights are kept in PyTorch (out, in) layout.
    """
    d_in = in_dim + cond_size
    k1, k2, k3, k4 = jax.random.split(key, 4)
    bound1 = 1.0 / math.sqrt(d_in)
    bound2 = 1.0 / math.sqrt(hid_dim)
    w_fc = jax.random.uniform(k1, (hid_dim, d_in), jnp.float32, -bound1, bound1)
    b_fc = jax.random.uniform(k2, (hid_dim,), jnp.float32, -bound1, bound1)
    w_out = jax.random.uniform(k3, (1, hid_dim), jnp.float32, -bound2, bound2)
    b_out = jax.random.uniform(k4, (1,), jnp.float32, -bound2, bound2)
    return w_fc, b_fc, w_out, b_out


def reference_forward(x, w_fc, b_fc, w_out, b_out):
    z = jnp.maximum(x @ w_fc.T + b_fc, 0.0)
    return z @ w_out.T + b_out


if __name__ == "__main__":
    key = jax.random.PRNGKey(0)
    in_dim, cond_size, hid_dim = 24, 8, 32
    batch = 256   # multiple of 128 -> exercises the tiled (grid=2), lane-dense path

    kx, kp = jax.random.split(key)
    x = jax.random.normal(kx, (batch, in_dim + cond_size), jnp.float32)
    w_fc, b_fc, w_out, b_out = init_params(kp, in_dim, hid_dim, cond_size)

    y = discriminator_forward(x, w_fc, b_fc, w_out, b_out)
    y = jax.block_until_ready(y)

    y_ref = reference_forward(x, w_fc, b_fc, w_out, b_out)
    assert y.shape == (batch, 1)
    assert jnp.allclose(y, y_ref, atol=1e-5, rtol=1e-5)

    # Also sanity-check the single-block (small batch) path.
    y_small = discriminator_forward(x[:8], w_fc, b_fc, w_out, b_out)
    y_small = jax.block_until_ready(y_small)
    assert jnp.allclose(y_small, y_ref[:8], atol=1e-5, rtol=1e-5)

    print("KERNEL_OK")
</pallas_src>

<mosaic_0001>
module attributes {stable_mosaic.version = 11 : i64} {
  func.func @_disc_kernel(%arg0: i32, %arg1: memref<32x128xf32, #tpu.memory_space<vmem>>, %arg2: memref<32x32xf32, #tpu.memory_space<vmem>>, %arg3: memref<32x1xf32, #tpu.memory_space<vmem>>, %arg4: memref<1x32xf32, #tpu.memory_space<vmem>>, %arg5: memref<1xf32, #tpu.memory_space<smem>>, %arg6: memref<1x128xf32, #tpu.memory_space<vmem>>) attributes {dimension_semantics = [#tpu.dimension_semantics<parallel>], iteration_bounds = array<i64: 2>, scalar_prefetch = 0 : i64, scratch_operands = 0 : i64, tpu.core_type = #tpu.core_type<tc>, window_params = [{transform_indices = @transform_0, window_bounds = array<i64: 32, 128>}, {pipeline_mode = #tpu.pipeline_mode<synchronous>, transform_indices = @transform_1, window_bounds = array<i64: 32, 32>}, {pipeline_mode = #tpu.pipeline_mode<synchronous>, transform_indices = @transform_2, window_bounds = array<i64: 32, 1>}, {pipeline_mode = #tpu.pipeline_mode<synchronous>, transform_indices = @transform_3, window_bounds = array<i64: 1, 32>}, {transform_indices = @transform_4, window_bounds = array<i64: 1>}, {transform_indices = @transform_5, window_bounds = array<i64: 1, 128>}]} {
    %c0 = arith.constant 0 : index
    %c0_0 = arith.constant 0 : index
    %0 = vector.load %arg2[%c0, %c0_0] : memref<32x32xf32, #tpu.memory_space<vmem>>, vector<32x32xf32>
    %c0_1 = arith.constant 0 : index
    %c0_2 = arith.constant 0 : index
    %1 = vector.load %arg1[%c0_1, %c0_2] : memref<32x128xf32, #tpu.memory_space<vmem>>, vector<32x128xf32>
    %cst = arith.constant dense<0.000000e+00> : vector<32x128xf32>
    %2 = tpu.matmul %0, %1, %cst {dimension_numbers = #tpu.dot_dimension_numbers<[1], [0], [0], [1], [0, 0, 1, 1], [], []>} : vector<32x32xf32>, vector<32x128xf32>, vector<32x128xf32> -> vector<32x128xf32>
    %c0_3 = arith.constant 0 : index
    %c0_4 = arith.constant 0 : index
    %3 = vector.load %arg3[%c0_3, %c0_4] : memref<32x1xf32, #tpu.memory_space<vmem>>, vector<32x1xf32>
    %4 = vector.broadcast %3 : vector<32x1xf32> to vector<32x128xf32>
    %5 = arith.addf %2, %4 : vector<32x128xf32>
    %cst_5 = arith.constant 0.000000e+00 : f32
    %6 = vector.broadcast %cst_5 : f32 to vector<32x128xf32>
    %7 = arith.maximumf %5, %6 : vector<32x128xf32>
    %c0_6 = arith.constant 0 : index
    %c0_7 = arith.constant 0 : index
    %8 = vector.load %arg4[%c0_6, %c0_7] : memref<1x32xf32, #tpu.memory_space<vmem>>, vector<1x32xf32>
    %cst_8 = arith.constant dense<0.000000e+00> : vector<1x128xf32>
    %9 = tpu.matmul %8, %7, %cst_8 {dimension_numbers = #tpu.dot_dimension_numbers<[1], [0], [0], [1], [0, 0, 1, 1], [], []>} : vector<1x32xf32>, vector<32x128xf32>, vector<1x128xf32> -> vector<1x128xf32>
    %c0_9 = arith.constant 0 : index
    %10 = memref.load %arg5[%c0_9] : memref<1xf32, #tpu.memory_space<smem>>
    %11 = vector.broadcast %10 : f32 to vector<1x128xf32>
    %12 = arith.addf %9, %11 : vector<1x128xf32>
    %c0_10 = arith.constant 0 : index
    %c0_11 = arith.constant 0 : index
    %13 = vector.load %arg6[%c0_10, %c0_11] : memref<1x128xf32, #tpu.memory_space<vmem>>, vector<1x128xf32>
    tpu.vector_store %arg6[%c0_10, %c0_11], %12 {strides = array<i32>} : memref<1x128xf32, #tpu.memory_space<vmem>>, vector<1x128xf32>,
    return
  }
  func.func @transform_0(%arg0: i32) -> (i32, i32) {
    %c0_i32 = arith.constant 0 : i32
    %c0_i32_0 = arith.constant 0 : i32
    return %c0_i32, %arg0 : i32, i32
  }
  func.func @transform_1(%arg0: i32) -> (i32, i32) {
    %c0_i32 = arith.constant 0 : i32
    %c0_i32_0 = arith.constant 0 : i32
    %c0_i32_1 = arith.constant 0 : i32
    return %c0_i32, %c0_i32_0 : i32, i32
  }
  func.func @transform_2(%arg0: i32) -> (i32, i32) {
    %c0_i32 = arith.constant 0 : i32
    %c0_i32_0 = arith.constant 0 : i32
    %c0_i32_1 = arith.constant 0 : i32
    return %c0_i32, %c0_i32_0 : i32, i32
  }
  func.func @transform_3(%arg0: i32) -> (i32, i32) {
    %c0_i32 = arith.constant 0 : i32
    %c0_i32_0 = arith.constant 0 : i32
    %c0_i32_1 = arith.constant 0 : i32
    return %c0_i32, %c0_i32_0 : i32, i32
  }
  func.func @transform_4(%arg0: i32) -> i32 {
    %c0_i32 = arith.constant 0 : i32
    %c0_i32_0 = arith.constant 0 : i32
    return %c0_i32 : i32
  }
  func.func @transform_5(%arg0: i32) -> (i32, i32) {
    %c0_i32 = arith.constant 0 : i32
    %c0_i32_0 = arith.constant 0 : i32
    return %c0_i32, %arg0 : i32, i32
  }
}

</mosaic_0001>

<llo_original>
// kernel: tpu_custom_call.1
$region0: #{tpu_custom_call.1}
  #allocation0 [shape = 'u32[]', space=smem, size = 0x4, offset = 0x4, fixed_abs, tag = 'smem constant byte address 0x4 - core index']
  #allocation1 [shape = 'u32[144,128]{1,0:T(1,128)}', space=vmem, size = 0x12000, scoped, tag = 'internal scratch']
  #allocation2 [shape = 'f32[1]{0:T(128)S(6)}', space=smem, size = 0x200, scoped, tag = 'scoped memory for tpu_custom_call.1']
  %s0 = inlined_call_operand.hbm [shape: f32[32,256], index: 0, kind: input, shape index: {}]
  %s1 = inlined_call_operand.vmem [shape: f32[32,32], index: 1, kind: input, shape index: {}]
  %s2 = inlined_call_operand.vmem [shape: f32[32,1], index: 2, kind: input, shape index: {}]
  %s3 = inlined_call_operand.vmem [shape: f32[1,32], index: 3, kind: input, shape index: {}]
  %s4 = inlined_call_operand.<no memory space> [shape: f32[1], index: 4, kind: input, shape index: {}]
  %s5 = inlined_call_operand.hbm [shape: f32[1,256], index: 5, kind: output, shape index: {}]
  %s6 = sld [smem:[#allocation0]]
  $region57: #{tpu_custom_call.1} parent=0
    _
  %s8 = ssub.s32 1, %s6
  %s9 = scalar_select 0, %s8, %s6
  %10 = sst [smem:[#allocation2]] %s4
  $region1: #{tpu_custom_call.1} parent=0
    #allocation3 [shape = 'u8[32768]{0}', space=vmem, size = 0x8000, scoped, tag = 'input window, operand 0']
    #allocation4 [shape = 's32[2]{0}', space=sflag, size = 0x8, scoped, tag = 'scoped memory for tpu_custom_call.1']
    #allocation5 [shape = 's32[2]{0}', space=sflag, size = 0x8, scoped, tag = 'scoped memory for tpu_custom_call.1']
    #allocation6 [shape = 'u8[1024]{0}', space=vmem, size = 0x400, scoped, tag = 'output window, operand 0']
    %11 = vsyncpa [#allocation4], 0
    %s12 = scalar_lea.sflag [#allocation4], 1
    %13 = vsyncpa %s12, 0
    %14 = vsyncpa [#allocation5], 0
    %s15 = scalar_lea.sflag [#allocation5], 1
    %16 = vsyncpa %s15, 0
    loop: start=0, step=1, limit=4
    $region2: #{tpu_custom_call.1} parent=1 // loop_pre_header
      _
    $region3: #{tpu_custom_call.1} parent=1 // loop_header
      %s18 = sphi 0, %s22
      %p19 = scmp.ge.s32.totalorder %s18, 4
      %s28 = sphi 0, %s30
      %s31 = sphi 0, %s28
      %s32 = sphi 0, %s31
      %s48 = sphi 0, %s32
      %s52 = sphi 0, %s52
      %s54 = sphi 0, %s52
      %s55 = sphi 0, %s54
      %s69 = sphi 0, %s55
      %s73 = sphi 0, %s73
      %s75 = sphi 0, %s73
      %s76 = sphi 0, %s75
      %s90 = sphi 0, %s76
      %s94 = sphi 0, %s94
      %s96 = sphi 0, %s94
      %s97 = sphi 0, %s96
      %s111 = sphi 0, %s97
      %s115 = sphi 0, %s115
      %s117 = sphi 0, %s115
      %s118 = sphi 0, %s117
      %s132 = sphi 0, %s118
      %s138 = sphi 0, %s140
      %s141 = sphi 0, %s138
      %s142 = sphi 0, %s141
      %s158 = sphi 0, %s142
    $region4: #{tpu_custom_call.1} parent=1 // loop_header_branch
      %21 = sbr.rel (%p19) target = $region8
    $region5: #{tpu_custom_call.1} parent=1 // loop_body
      %s23 = ssub.s32 %s18, 1
      %s24 = ssub.s32 %s18, 2
      %s25 = sadd.s32 %s18, 1
      %s26 = ssub.s32 %s18, %s25
      %p27 = scmp.eq.s32.totalorder %s26, 0
      %s29 = sadd.s32 %s28, 1
      %s30 = scalar_select %p27, %s28, %s29
      %p33 = pneg %p27
      %p34 = scmp.eq.s32.totalorder %s18, 1
      %p35 = por %p33, %p34
      %p36 = scmp.ne.s32.totalorder %s28, %s31
      %p37 = scmp.eq.s32.totalorder %s18, 0
      %p38 = por %p36, %p37
      %p39 = scmp.ne.s32.totalorder %s28, %s31
      %p40 = scmp.eq.s32.totalorder %s23, 1
      %p41 = por %p39, %p40
      %p42 = scmp.ne.s32.totalorder %s31, %s32
      %p43 = scmp.eq.s32.totalorder %s23, 0
      %p44 = por %p42, %p43
      %p45 = scmp.ne.s32.totalorder %s31, %s32
      %p46 = scmp.eq.s32.totalorder %s24, 1
      %p47 = por %p45, %p46
      %p49 = scmp.ne.s32.totalorder %s32, %s48
      %p50 = scmp.eq.s32.totalorder %s24, 0
      %p51 = por %p49, %p50
      %s53 = sadd.s32 %s52, 1
      %p56 = scmp.eq.s32.totalorder %s18, 1
      %p57 = scmp.ne.s32.totalorder %s52, %s54
      %p58 = scmp.eq.s32.totalorder %s18, 0
      %p59 = por %p57, %p58
      %p60 = scmp.ne.s32.totalorder %s52, %s54
      %p61 = scmp.eq.s32.totalorder %s23, 1
      %p62 = por %p60, %p61
      %p63 = scmp.ne.s32.totalorder %s54, %s55
      %p64 = scmp.eq.s32.totalorder %s23, 0
      %p65 = por %p63, %p64
      %p66 = scmp.ne.s32.totalorder %s54, %s55
      %p67 = scmp.eq.s32.totalorder %s24, 1
      %p68 = por %p66, %p67
      %p70 = scmp.ne.s32.totalorder %s55, %s69
      %p71 = scmp.eq.s32.totalorder %s24, 0
      %p72 = por %p70, %p71
      %s74 = sadd.s32 %s73, 1
      %p77 = scmp.eq.s32.totalorder %s18, 1
      %p78 = scmp.ne.s32.totalorder %s73, %s75
      %p79 = scmp.eq.s32.totalorder %s18, 0
      %p80 = por %p78, %p79
      %p81 = scmp.ne.s32.totalorder %s73, %s75
      %p82 = scmp.eq.s32.totalorder %s23, 1
      %p83 = por %p81, %p82
      %p84 = scmp.ne.s32.totalorder %s75, %s76
      %p85 = scmp.eq.s32.totalorder %s23, 0
      %p86 = por %p84, %p85
      %p87 = scmp.ne.s32.totalorder %s75, %s76
      %p88 = scmp.eq.s32.totalorder %s24, 1
      %p89 = por %p87, %p88
      %p91 = scmp.ne.s32.totalorder %s76, %s90
      %p92 = scmp.eq.s32.totalorder %s24, 0
      %p93 = por %p91, %p92
      %s95 = sadd.s32 %s94, 1
      %p98 = scmp.eq.s32.totalorder %s18, 1
      %p99 = scmp.ne.s32.totalorder %s94, %s96
      %p100 = scmp.eq.s32.totalorder %s18, 0
      %p101 = por %p99, %p100
      %p102 = scmp.ne.s32.totalorder %s94, %s96
      %p103 = scmp.eq.s32.totalorder %s23, 1
      %p104 = por %p102, %p103
      %p105 = scmp.ne.s32.totalorder %s96, %s97
      %p106 = scmp.eq.s32.totalorder %s23, 0
      %p107 = por %p105, %p106
      %p108 = scmp.ne.s32.totalorder %s96, %s97
      %p109 = scmp.eq.s32.totalorder %s24, 1
      %p110 = por %p108, %p109
      %p112 = scmp.ne.s32.totalorder %s97, %s111
      %p113 = scmp.eq.s32.totalorder %s24, 0
      %p114 = por %p112, %p113
      %s116 = sadd.s32 %s115, 1
      %p119 = scmp.eq.s32.totalorder %s18, 1
      %p120 = scmp.ne.s32.totalorder %s115, %s117
      %p121 = scmp.eq.s32.totalorder %s18, 0
      %p122 = por %p120, %p121
      %p123 = scmp.ne.s32.totalorder %s115, %s117
      %p124 = scmp.eq.s32.totalorder %s23, 1
      %p125 = por %p123, %p124
      %p126 = scmp.ne.s32.totalorder %s117, %s118
      %p127 = scmp.eq.s32.totalorder %s23, 0
      %p128 = por %p126, %p127
      %p129 = scmp.ne.s32.totalorder %s117, %s118
      %p130 = scmp.eq.s32.totalorder %s24, 1
      %p131 = por %p129, %p130
      %p133 = scmp.ne.s32.totalorder %s118, %s132
      %p134 = scmp.eq.s32.totalorder %s24, 0
      %p135 = por %p133, %p134
      %s136 = ssub.s32 %s18, %s25
      %p137 = scmp.eq.s32.totalorder %s136, 0
      %s139 = sadd.s32 %s138, 1
      %s140 = scalar_select %p137, %s138, %s139
      %p143 = pneg %p137
      %p144 = scmp.eq.s32.totalorder %s18, 1
      %p145 = por %p143, %p144
      %p146 = scmp.ne.s32.totalorder %s138, %s141
      %p147 = scmp.eq.s32.totalorder %s18, 0
      %p148 = por %p146, %p147
      %p149 = scmp.ne.s32.totalorder %s138, %s141
      %p150 = scmp.eq.s32.totalorder %s23, 1
      %p151 = por %p149, %p150
      %p152 = scmp.ne.s32.totalorder %s141, %s142
      %p153 = scmp.eq.s32.totalorder %s23, 0
      %p154 = por %p152, %p153
      %p155 = scmp.ne.s32.totalorder %s141, %s142
      %p156 = scmp.eq.s32.totalorder %s24, 1
      %p157 = por %p155, %p156
      %p159 = scmp.ne.s32.totalorder %s142, %s158
      %p160 = scmp.eq.s32.totalorder %s24, 0
      %p161 = por %p159, %p160
      %p162 = scmp.le.s32.totalorder 1, %s18
      %p163 = scmp.lt.s32.totalorder %s18, 3
      %p164 = pnand %p162, %p163
      %p165 = pneg %p164
      // Predicated region
      $region9: #{tpu_custom_call.1} parent=5 // pred_check
        _
      $region10: #{tpu_custom_call.1} parent=5 // pred_check_branch
        %167 = sbr.rel (%p164) target = $region12
      $region11: #{tpu_custom_call.1} parent=5 // pred_region
        %s168 = ssub.s32 %s18, 1
        // Predicated region
        $region13: #{tpu_custom_call.1} parent=11 // pred_check
          %p169 = pneg %p65
        $region14: #{tpu_custom_call.1} parent=11 // pred_check_branch
          %171 = sbr.rel (%p169) target = $region16
        $region15: #{tpu_custom_call.1} parent=11 // pred_region
          _
        $region16: #{tpu_custom_call.1} parent=11 // pred_fallthru
          _
        // Predicated region
        $region17: #{tpu_custom_call.1} parent=11 // pred_check
          %p172 = pneg %p86
        $region18: #{tpu_custom_call.1} parent=11 // pred_check_branch
          %174 = sbr.rel (%p172) target = $region20
        $region19: #{tpu_custom_call.1} parent=11 // pred_region
          _
        $region20: #{tpu_custom_call.1} parent=11 // pred_fallthru
          _
        // Predicated region
        $region21: #{tpu_custom_call.1} parent=11 // pred_check
          %p175 = pneg %p107
        $region22: #{tpu_custom_call.1} parent=11 // pred_check_branch
          %177 = sbr.rel (%p175) target = $region24
        $region23: #{tpu_custom_call.1} parent=11 // pred_region
          _
        $region24: #{tpu_custom_call.1} parent=11 // pred_fallthru
          _
        // Predicated region
        $region25: #{tpu_custom_call.1} parent=11 // pred_check
          %p178 = pneg %p128
        $region26: #{tpu_custom_call.1} parent=11 // pred_check_branch
          %180 = sbr.rel (%p178) target = $region28
        $region27: #{tpu_custom_call.1} parent=11 // pred_region
          _
        $region28: #{tpu_custom_call.1} parent=11 // pred_fallthru
          _
      $region12: #{tpu_custom_call.1} parent=5 // pred_fallthru
        _
      %p181 = scmp.lt.s32.totalorder %s18, 2
      // Predicated region
      $region29: #{tpu_custom_call.1} parent=5 // pred_check
        %p182 = pneg %p181
      $region30: #{tpu_custom_call.1} parent=5 // pred_check_branch
        %184 = sbr.rel (%p182) target = $region32
      $region31: #{tpu_custom_call.1} parent=5 // pred_region
        // Predicated region
        $region33: #{tpu_custom_call.1} parent=31 // pred_check
          %p185 = pneg %p38
        $region34: #{tpu_custom_call.1} parent=31 // pred_check_branch
          %187 = sbr.rel (%p185) target = $region36
        $region35: #{tpu_custom_call.1} parent=31 // pred_region
          %s188 = sand.u32 %s28, 1
          %s189 = scalar_lea.sflag [#allocation4], %s188
          %s190 = sand.u32 %s28, 1
          %s191 = smul.addr %s190, 32
          %s192 = scalar_lea.vmem [#allocation3], %s191
          %s194 = ssub.s32 512, 512
          %195 = vsyncadd %s189, %s194
          %s196 = smul.addr %s18, 128
          %s197 = scalar_lea.hbm %s0, %s196
          %s198 = sshll.u32 %s192, 4
          %s199 = int_to_ptr.vmem [resolvable:$true] %s198
          %204 = dma.hbm_to_vmem [thread:$0]  %s197, 512, %s199, %s189, 256, 128, 8
        $region36: #{tpu_custom_call.1} parent=31 // pred_fallthru
          _
      $region32: #{tpu_custom_call.1} parent=5 // pred_fallthru
        _
      %p205 = scmp.le.s32.totalorder 1, %s18
      %p206 = scmp.lt.s32.totalorder %s18, 3
      %p207 = pnand %p205, %p206
      %p208 = pneg %p207
      // Predicated region
      $region37: #{tpu_custom_call.1} parent=5 // pred_check
        _
      $region38: #{tpu_custom_call.1} parent=5 // pred_check_branch
        %210 = sbr.rel (%p207) target = $region40
      $region39: #{tpu_custom_call.1} parent=5 // pred_region
        %s211 = ssub.s32 %s18, 1
        %s212 = sand.u32 %s31, 1
        %s213 = scalar_lea.sflag [#allocation4], %s212
        %s214 = sand.u32 %s31, 1
        %s215 = smul.addr %s214, 32
        %s216 = scalar_lea.vmem [#allocation3], %s215
        // Predicated region
        $region41: #{tpu_custom_call.1} parent=39 // pred_check
          %p217 = pneg %p44
        $region42: #{tpu_custom_call.1} parent=39 // pred_check_branch
          %219 = sbr.rel (%p217) target = $region44
        $region43: #{tpu_custom_call.1} parent=39 // pred_region
          %220 = dma.done %s213, 512
        $region44: #{tpu_custom_call.1} parent=39 // pred_fallthru
          _
        %s221 = sand.u32 %s31, 1
        %s222 = scalar_lea.sflag [#allocation4], %s221
        %s223 = sand.u32 %s31, 1
        %s224 = smul.addr %s223, 32
        %s225 = scalar_lea.vmem [#allocation3], %s224
        %p226 = pneg %p44
        %p227 = pneg %p41
        %p228 = pneg %p65
        %p229 = pneg %p62
        %p230 = pneg %p86
        %p231 = pneg %p83
        %p232 = pneg %p107
        %p233 = pneg %p104
        %p234 = pneg %p128
        %p235 = pneg %p125
        %p236 = pneg %p154
        %p237 = pneg %p151
        %s238 = sand.u32 %s141, 1
        %s239 = scalar_lea.sflag [#allocation5], %s238
        %s240 = sand.u32 %s141, 1
        %s241 = scalar_lea.vmem [#allocation6], %s240
        %v242 = vld [vmem:[%s1] sm:$0xff]
        %v243 = vld [vmem:[%s1 + $0x8] sm:$0xff]
        %v244 = vld [vmem:[%s1 + $0x10] sm:$0xff]
        %v245 = vld [vmem:[%s1 + $0x18] sm:$0xff]
        %v246 = vld [vmem:[%s216] sm:$0xff]
        %v247 = vld [vmem:[%s216 + $0x8] sm:$0xff]
        %v248 = vld [vmem:[%s216 + $0x10] sm:$0xff]
        %v249 = vld [vmem:[%s216 + $0x18] sm:$0xff]
        %v250 = vld [vmem:[%s2] sm:$0xff]
        %v251 = vld [vmem:[%s2 + $0x8] sm:$0xff]
        %v252 = vld [vmem:[%s2 + $0x10] sm:$0xff]
        %v253 = vld [vmem:[%s2 + $0x18] sm:$0xff]
        %255 = vset.pattern.permute.xlu0 0
        %256 = vperm.xlu0 %255, %v250
        %v257 = vpop.permute.xlu0 %256
        %260 = vset.pattern.permute.xlu0 0
        %261 = vperm.xlu0 %260, %v251
        %v262 = vpop.permute.xlu0 %261
        %265 = vset.pattern.permute.xlu0 0
        %266 = vperm.xlu0 %265, %v252
        %v267 = vpop.permute.xlu0 %266
        %270 = vset.pattern.permute.xlu0 0
        %271 = vperm.xlu0 %270, %v253
        %v272 = vpop.permute.xlu0 %271
        %vm274 = vcmask 261120
        %v276 = vsel %vm274, %v242, 0
        %v279 = vsel %vm274, %v243, 0
        %v282 = vsel %vm274, %v244, 0
        %v285 = vsel %vm274, %v245, 0
        %287 = vmatprep.subr.mxu0 0.0
        %288 = vmatpush1.msra.mxu0 %v246
        %289 = vmatprep.subr.mxu0 0.0
        %290 = vmatpush1.msra.mxu0 %v247
        %291 = vmatprep.subr.mxu0 0.0
        %292 = vmatpush1.msra.mxu0 %v248
        %293 = vmatprep.subr.mxu0 0.0
        %294 = vmatpush1.msra.mxu0 %v249
        %295 = vmatprep.subr.mxu0 0.0
        %296 = vmatpush1.msra.mxu0 0.0
        %297 = vmatprep.subr.mxu0 0.0
        %298 = vmatpush1.msra.mxu0 0.0
        %299 = vmatprep.subr.mxu0 0.0
        %300 = vmatpush1.msra.mxu0 0.0
        %301 = vmatprep.subr.mxu0 0.0
        %302 = vmatpush1.msra.mxu0 0.0
        %303 = vmatprep.subr.mxu0 0.0
        %304 = vmatpush1.msra.mxu0 0.0
        %305 = vmatprep.subr.mxu0 0.0
        %306 = vmatpush1.msra.mxu0 0.0
        %307 = vmatprep.subr.mxu0 0.0
        %308 = vmatpush1.msra.mxu0 0.0
        %309 = vmatprep.subr.mxu0 0.0
        %310 = vmatpush1.msra.mxu0 0.0
        %311 = vmatprep.subr.mxu0 0.0
        %312 = vmatpush1.msra.mxu0 0.0
        %313 = vmatprep.subr.mxu0 0.0
        %314 = vmatpush1.msra.mxu0 0.0
        %315 = vmatprep.subr.mxu0 0.0
        %316 = vmatpush1.msra.mxu0 0.0
        %317 = vmatprep.subr.mxu0 0.0
        %318 = vmatpush1.msra.mxu0 0.0
        %319 = vmatprep.subr.mxu0 0.0
        %320 = vmatpush1.msra.mxu0 0.0
        %321 = vmatprep.subr.mxu0 0.0
        %322 = vmatpush1.msra.mxu0 0.0
        %323 = vmatprep.subr.mxu0 0.0
        %324 = vmatpush1.msra.mxu0 0.0
        %325 = vmatprep.subr.mxu0 0.0
        %326 = vmatpush1.msra.mxu0 0.0
        %327 = vmatprep.subr.mxu0 0.0
        %328 = vmatpush1.msra.mxu0 0.0
        %329 = vmatprep.subr.mxu0 0.0
        %330 = vmatpush1.msra.mxu0 0.0
        %331 = vmatprep.subr.mxu0 0.0
        %332 = vmatpush1.msra.mxu0 0.0
        %333 = vmatprep.subr.mxu0 0.0
        %334 = vmatpush1.msra.mxu0 0.0
        %335 = vmatprep.subr.mxu0 0.0
        %336 = vmatpush1.msra.mxu0 0.0
        %337 = vmatprep.subr.mxu0 0.0
        %338 = vmatpush1.msra.mxu0 0.0
        %339 = vmatprep.subr.mxu0 0.0
        %340 = vmatpush1.msra.mxu0 0.0
        %341 = vmatprep.subr.mxu0 0.0
        %342 = vmatpush1.msra.mxu0 0.0
        %343 = vmatprep.subr.mxu0 0.0
        %344 = vmatpush1.msra.mxu0 0.0
        %345 = vmatprep.subr.mxu0 0.0
        %346 = vmatpush1.msra.mxu0 0.0
        %347 = vmatprep.subr.mxu0 0.0
        %348 = vmatpush1.msra.mxu0 0.0
        %349 = vmatprep.subr.mxu0 0.0
        %350 = vmatpush1.msra.mxu0 0.0
        %351 = vmatprep.mubr.f32.mxu0 0.0
        %352 = vmatmul.mubr.f32.gmra.mrb[0].mxu0 %v276
        %v353 = vpop.f32.mrb[0].mxu0
        %v354 = vadd.f32 %v257, %v353
        %v355 = vpop.f32.mrb[0].mxu0
        %356 = vmatprep.mubr.f32.mxu0 0.0
        %357 = vmatmul.mubr.f32.gmra.mrb[0].mxu0 %v279
        %v358 = vpop.f32.mrb[0].mxu0
        %v359 = vadd.f32 %v262, %v358
        %v360 = vpop.f32.mrb[0].mxu0
        %361 = vmatprep.mubr.f32.mxu0 0.0
        %362 = vmatmul.mubr.f32.gmra.mrb[0].mxu0 %v282
        %v363 = vpop.f32.mrb[0].mxu0
        %v364 = vadd.f32 %v267, %v363
        %v365 = vpop.f32.mrb[0].mxu0
        %366 = vmatprep.mubr.f32.mxu0 0.0
        %367 = vmatmul.mubr.f32.gmra.mrb[0].mxu0 %v285
        %v368 = vpop.f32.mrb[0].mxu0
        %v369 = vadd.f32 %v272, %v368
        %v370 = vpop.f32.mrb[0].mxu0
        %371 = vdwg.mxu0
        %v372 = vmax.f32 %v354, 0.0
        %v373 = vmax.f32 %v359, 0.0
        %v374 = vmax.f32 %v364, 0.0
        %v375 = vmax.f32 %v369, 0.0
        %v376 = vld [vmem:[%s3] sm:$0x1]
        %s377 = sld [smem:[#allocation2]]
        %v378 = vstv %s377
        %v380 = vsel %vm274, %v376, 0
        %382 = vmatprep.subr.mxu0 0.0
        %383 = vmatpush1.msra.mxu0 %v372
        %384 = vmatprep.subr.mxu0 0.0
        %385 = vmatpush1.msra.mxu0 %v373
        %386 = vmatprep.subr.mxu0 0.0
        %387 = vmatpush1.msra.mxu0 %v374
        %388 = vmatprep.subr.mxu0 0.0
        %389 = vmatpush1.msra.mxu0 %v375
        %390 = vmatprep.subr.mxu0 0.0
        %391 = vmatpush1.msra.mxu0 0.0
        %392 = vmatprep.subr.mxu0 0.0
        %393 = vmatpush1.msra.mxu0 0.0
        %394 = vmatprep.subr.mxu0 0.0
        %395 = vmatpush1.msra.mxu0 0.0
        %396 = vmatprep.subr.mxu0 0.0
        %397 = vmatpush1.msra.mxu0 0.0
        %398 = vmatprep.subr.mxu0 0.0
        %399 = vmatpush1.msra.mxu0 0.0
        %400 = vmatprep.subr.mxu0 0.0
        %401 = vmatpush1.msra.mxu0 0.0
        %402 = vmatprep.subr.mxu0 0.0
        %403 = vmatpush1.msra.mxu0 0.0
        %404 = vmatprep.subr.mxu0 0.0
        %405 = vmatpush1.msra.mxu0 0.0
        %406 = vmatprep.subr.mxu0 0.0
        %407 = vmatpush1.msra.mxu0 0.0
        %408 = vmatprep.subr.mxu0 0.0
        %409 = vmatpush1.msra.mxu0 0.0
        %410 = vmatprep.subr.mxu0 0.0
        %411 = vmatpush1.msra.mxu0 0.0
        %412 = vmatprep.subr.mxu0 0.0
        %413 = vmatpush1.msra.mxu0 0.0
        %414 = vmatprep.subr.mxu0 0.0
        %415 = vmatpush1.msra.mxu0 0.0
        %416 = vmatprep.subr.mxu0 0.0
        %417 = vmatpush1.msra.mxu0 0.0
        %418 = vmatprep.subr.mxu0 0.0
        %419 = vmatpush1.msra.mxu0 0.0
        %420 = vmatprep.subr.mxu0 0.0
        %421 = vmatpush1.msra.mxu0 0.0
        %422 = vmatprep.subr.mxu0 0.0
        %423 = vmatpush1.msra.mxu0 0.0
        %424 = vmatprep.subr.mxu0 0.0
        %425 = vmatpush1.msra.mxu0 0.0
        %426 = vmatprep.subr.mxu0 0.0
        %427 = vmatpush1.msra.mxu0 0.0
        %428 = vmatprep.subr.mxu0 0.0
        %429 = vmatpush1.msra.mxu0 0.0
        %430 = vmatprep.subr.mxu0 0.0
        %431 = vmatpush1.msra.mxu0 0.0
        %432 = vmatprep.subr.mxu0 0.0
        %433 = vmatpush1.msra.mxu0 0.0
        %434 = vmatprep.subr.mxu0 0.0
        %435 = vmatpush1.msra.mxu0 0.0
        %436 = vmatprep.subr.mxu0 0.0
        %437 = vmatpush1.msra.mxu0 0.0
        %438 = vmatprep.subr.mxu0 0.0
        %439 = vmatpush1.msra.mxu0 0.0
        %440 = vmatprep.subr.mxu0 0.0
        %441 = vmatpush1.msra.mxu0 0.0
        %442 = vmatprep.subr.mxu0 0.0
        %443 = vmatpush1.msra.mxu0 0.0
        %444 = vmatprep.subr.mxu0 0.0
        %445 = vmatpush1.msra.mxu0 0.0
        %446 = vmatprep.mubr.f32.mxu0 0.0
        %447 = vmatmul.mubr.f32.gmra.mrb[0].mxu0 %v380
        %v448 = vpop.f32.mrb[0].mxu0
        %v449 = vadd.f32 %v378, %v448
        %v450 = vpop.f32.mrb[0].mxu0
        %451 = vdwg.mxu0
        %452 = vst [vmem:[%s241] sm:$0x1] %v449
        %s453 = sand.u32 %s141, 1
        %s454 = scalar_lea.sflag [#allocation5], %s453
        %s455 = sand.u32 %s141, 1
        %s456 = scalar_lea.vmem [#allocation6], %s455
        // Predicated region
        $region45: #{tpu_custom_call.1} parent=39 // pred_check
          %p457 = pneg %p151
        $region46: #{tpu_custom_call.1} parent=39 // pred_check_branch
          %459 = sbr.rel (%p457) target = $region48
        $region47: #{tpu_custom_call.1} parent=39 // pred_region
          %s461 = ssub.s32 16, 16
          %462 = vsyncadd %s454, %s461
          %s463 = smul.addr %s23, 16
          %s464 = scalar_lea.hbm %s5, %s463
          %s466 = sshll.u32 %s456, 4
          %s467 = int_to_ptr.vmem [resolvable:$true] %s466
          %469 = dma.vmem_to_hbm [thread:$0]  %s467, 16, %s464, %s454
        $region48: #{tpu_custom_call.1} parent=39 // pred_fallthru
          _
      $region40: #{tpu_custom_call.1} parent=5 // pred_fallthru
        _
      %p470 = scmp.le.s32.totalorder 2, %s18
      // Predicated region
      $region49: #{tpu_custom_call.1} parent=5 // pred_check
        %p471 = pneg %p470
      $region50: #{tpu_custom_call.1} parent=5 // pred_check_branch
        %473 = sbr.rel (%p471) target = $region52
      $region51: #{tpu_custom_call.1} parent=5 // pred_region
        %s474 = ssub.s32 %s18, 2
        // Predicated region
        $region53: #{tpu_custom_call.1} parent=51 // pred_check
          %p475 = pneg %p157
        $region54: #{tpu_custom_call.1} parent=51 // pred_check_branch
          %477 = sbr.rel (%p475) target = $region56
        $region55: #{tpu_custom_call.1} parent=51 // pred_region
          %s478 = sand.u32 %s142, 1
          %s479 = scalar_lea.sflag [#allocation5], %s478
          %s480 = sand.u32 %s142, 1
          %s481 = scalar_lea.vmem [#allocation6], %s480
          %482 = dma.done %s479, 16
        $region56: #{tpu_custom_call.1} parent=51 // pred_fallthru
          _
      $region52: #{tpu_custom_call.1} parent=5 // pred_fallthru
        _
    $region6: #{tpu_custom_call.1} parent=1 // loop_footer
      %s22 = sadd.s32 1, %s18
    $region7: #{tpu_custom_call.1} parent=1 // loop_footer_branch
      %17 = sbr.rel target = $region3
    $region8: #{tpu_custom_call.1} parent=1 // loop_exit
      _
    %483 = vsyncpa [#allocation4], 1
    %s484 = scalar_lea.sflag [#allocation4], 1
    %485 = vsyncpa %s484, 1
    %486 = vsyncpa [#allocation5], 1
    %s487 = scalar_lea.sflag [#allocation5], 1
    %488 = vsyncpa %s487, 1

</llo_original>
